<compile_context>
chip_gen: v7x
topology: tpu7x:2x2x1
jax: 0.10.0
libtpu: 0.0.40
codegen_flags: <defaults>
</compile_context>

<pallas_src>
import jax
import jax.numpy as jnp
from jax.experimental import pallas as pl
from jax.experimental.pallas import tpu as pltpu

LANES = 128
TARGET_BLOCK_BYTES = 4 * 1024 * 1024   # ~4 MiB per input block per step
VMEM_LIMIT_BYTES = 32 * 1024 * 1024    # 2 inputs x 2 bufs x 4 MiB = 16 MiB << 32 MiB


def _make_l1_kernel(rows_main, total_blocks, bph, part_rows, needs_mask):
    """Build the reduction kernel with all sizes closed over as static constants."""

    def kernel(gt_ref, sr_ref, out_ref):
        c = pl.program_id(0)          # which half of the row range (TensorCore split)
        k = pl.program_id(1)          # row-block within this half (reduction axis)

        # zero the resident output accumulator at the first reduction step
        @pl.when(k == 0)
        def _():
            out_ref[...] = jnp.zeros_like(out_ref)

        block_rows = gt_ref.shape[0]
        blk = c * bph + k             # unclamped logical block index

        def accumulate(mask_rows):
            g = gt_ref[...].astype(jnp.float32)
            s = sr_ref[...].astype(jnp.float32)
            contrib = jnp.abs(g - s)
            if mask_rows:
                # row-only mask: covers the partial last block and the fully
                # masked clamped-duplicate blocks of the second half.
                row0 = blk * block_rows
                row_idx = jax.lax.broadcasted_iota(
                    jnp.int32, (block_rows, LANES), 0)
                valid = (row0 + row_idx) < rows_main
                contrib = jnp.where(valid, contrib, jnp.float32(0.0))
            # (block_rows,128) -> (part_rows,128): part_rows/8 independent
            # (8,128) accumulation chains -> ILP across VALU slots.
            out_ref[...] += contrib.reshape(-1, part_rows, LANES).sum(axis=0)[None]

        if needs_mask:
            is_edge = blk >= (total_blocks - 1)

            @pl.when(jnp.logical_not(is_edge))
            def _():
                accumulate(False)          # steady state: no mask work at all

            @pl.when(is_edge)
            def _():
                accumulate(True)           # last real block + duplicates
        else:
            accumulate(False)

    return kernel


def l1_loss_pallas(gt: jax.Array, sr: jax.Array) -> jax.Array:
    """mean(|gt - sr|) — equivalent to torch.nn.L1Loss()(GT, SR)."""
    assert gt.shape == sr.shape, "L1Loss requires matching shapes"
    n_elems = int(gt.size)

    gt_flat = gt.reshape(-1)
    sr_flat = sr.reshape(-1)

    itemsize = max(jnp.dtype(gt.dtype).itemsize, jnp.dtype(sr.dtype).itemsize)
    sublane = 8 if itemsize >= 4 else 16           # min row granularity per dtype
    rows_total = n_elems // LANES

    # prefer 32-row partials (4 independent (8,128) chains); shrink for tiny inputs
    part_rows = 32
    while part_rows > sublane and rows_total < part_rows:
        part_rows //= 2

    rows_main = (rows_total // part_rows) * part_rows
    n_main = rows_main * LANES

    # Ragged tail (< part_rows*128 + 128 elements): plain JAX, no full-array pad/copy.
    if n_main < n_elems:
        tail = jnp.sum(jnp.abs(gt_flat[n_main:].astype(jnp.float32)
                               - sr_flat[n_main:].astype(jnp.float32)))
    else:
        tail = jnp.float32(0.0)

    if rows_main == 0:
        # Input too small for even one (sublane,128) tile — pure JAX path.
        return tail / jnp.float32(n_elems)

    gt2d = gt_flat[:n_main].reshape(rows_main, LANES)
    sr2d = sr_flat[:n_main].reshape(rows_main, LANES)

    # byte-based block sizing, rounded down to part_rows granularity
    max_rows = max(part_rows,
                   (TARGET_BLOCK_BYTES // (LANES * itemsize)) // part_rows * part_rows)
    block_rows = min(max_rows, rows_main)
    total_blocks = -(-rows_main // block_rows)                 # cdiv
    num_splits = 2 if total_blocks >= 2 else 1                 # 2-way TC split on v7x
    bph = -(-total_blocks // num_splits)                       # blocks per half
    grid = (num_splits, bph)

    # masking only needed if the last block is partial or a clamped duplicate exists
    needs_mask = (rows_main % block_rows != 0) or (num_splits * bph != total_blocks)

    def in_map(c, k):
        # clamp so the duplicate block of an odd split never reads out of bounds;
        # the kernel masks it (keyed off the UNclamped blk) so it contributes 0.
        return (jnp.minimum(c * bph + k, total_blocks - 1), 0)

    kernel = _make_l1_kernel(rows_main, total_blocks, bph, part_rows, needs_mask)

    partial = pl.pallas_call(
        kernel,
        out_shape=jax.ShapeDtypeStruct((num_splits, part_rows, LANES), jnp.float32),
        grid=grid,
        in_specs=[
            pl.BlockSpec((block_rows, LANES), in_map),
            pl.BlockSpec((block_rows, LANES), in_map),
        ],
        out_specs=pl.BlockSpec((1, part_rows, LANES), lambda c, k: (c, 0, 0)),
        compiler_params=pltpu.CompilerParams(
            dimension_semantics=("parallel", "arbitrary"),
            vmem_limit_bytes=VMEM_LIMIT_BYTES,
        ),
        cost_estimate=pl.CostEstimate(
            flops=3 * n_elems,
            transcendentals=0,
            bytes_accessed=int(2 * n_main * itemsize),
        ),
    )(gt2d, sr2d)

    # tiny final reduce over the (num_splits, 32, 128) partial sums, then the mean
    return (jnp.sum(partial) + tail) / jnp.float32(n_elems)


class GetLossPallas:
    """Mirror of RCAN.get_loss: forward returns L1Loss(GT, SR).
    TVLoss / Projection are constructed in the torch module's __init__ but never
    used in forward, so they are intentionally omitted here."""

    def __call__(self, input_data, SR, criterion_data=()):
        GT = input_data["gt"]
        return l1_loss_pallas(GT, SR)


if __name__ == "__main__":
    key = jax.random.PRNGKey(0)
    loss_fn = GetLossPallas()

    # Case 1: NCHW, small lane-aligned shape: batch=2, channels=4, spatial=16x16
    k1, k2, k3, k4 = jax.random.split(key, 4)
    gt = jax.random.normal(k1, (2, 4, 16, 16), dtype=jnp.float32)
    sr = jax.random.normal(k2, (2, 4, 16, 16), dtype=jnp.float32)
    loss = jax.block_until_ready(loss_fn({"gt": gt}, sr))
    ref = jnp.mean(jnp.abs(gt - sr))
    assert jnp.allclose(loss, ref, atol=1e-5, rtol=1e-5), (loss, ref)

    # Case 2: non-128-aligned element count exercises the aligned-prefix + JAX tail path
    gt2 = jax.random.normal(k3, (2, 3, 17, 19), dtype=jnp.float32)
    sr2 = jax.random.normal(k4, (2, 3, 17, 19), dtype=jnp.float32)
    loss2 = jax.block_until_ready(loss_fn({"gt": gt2}, sr2))
    ref2 = jnp.mean(jnp.abs(gt2 - sr2))
    assert jnp.allclose(loss2, ref2, atol=1e-5, rtol=1e-5), (loss2, ref2)

    print("KERNEL_OK")
</pallas_src>

<mosaic_0001>
module attributes {stable_mosaic.version = 11 : i64} {
  func.func @kernel(%arg0: i32, %arg1: i32, %arg2: memref<16x128xf32, #tpu.memory_space<vmem>>, %arg3: memref<16x128xf32, #tpu.memory_space<vmem>>, %arg4: memref<1x16x128xf32, #tpu.memory_space<vmem>>) attributes {dimension_semantics = [#tpu.dimension_semantics<parallel>, #tpu.dimension_semantics<arbitrary>], iteration_bounds = array<i64: 1, 1>, scalar_prefetch = 0 : i64, scratch_operands = 0 : i64, tpu.core_type = #tpu.core_type<tc>, window_params = [{transform_indices = @transform_0, window_bounds = array<i64: 16, 128>}, {transform_indices = @transform_1, window_bounds = array<i64: 16, 128>}, {transform_indices = @transform_2, window_bounds = array<i64: 1, 16, 128>}]} {
    %c0_i32 = arith.constant 0 : i32
    %0 = arith.cmpi eq, %arg1, %c0_i32 : i32
    %1 = arith.extui %0 : i1 to i32
    %c0_i32_0 = arith.constant 0 : i32
    %2 = arith.cmpi ne, %1, %c0_i32_0 : i32
    scf.if %2 {
      %cst_10 = arith.constant 0.000000e+00 : f32
      %13 = vector.broadcast %cst_10 : f32 to vector<1x16x128xf32>
      %c0_11 = arith.constant 0 : index
      %c0_12 = arith.constant 0 : index
      %c0_13 = arith.constant 0 : index
      %14 = vector.load %arg4[%c0_11, %c0_12, %c0_13] : memref<1x16x128xf32, #tpu.memory_space<vmem>>, vector<1x16x128xf32>
      tpu.vector_store %arg4[%c0_11, %c0_12, %c0_13], %13 {strides = array<i32>} : memref<1x16x128xf32, #tpu.memory_space<vmem>>, vector<1x16x128xf32>,
    } else {
    }
    %c0 = arith.constant 0 : index
    %c0_1 = arith.constant 0 : index
    %3 = vector.load %arg2[%c0, %c0_1] : memref<16x128xf32, #tpu.memory_space<vmem>>, vector<16x128xf32>
    %c0_2 = arith.constant 0 : index
    %c0_3 = arith.constant 0 : index
    %4 = vector.load %arg3[%c0_2, %c0_3] : memref<16x128xf32, #tpu.memory_space<vmem>>, vector<16x128xf32>
    %5 = arith.subf %3, %4 : vector<16x128xf32>
    %6 = math.absf %5 : vector<16x128xf32>
    %c0_4 = arith.constant 0 : index
    %c0_5 = arith.constant 0 : index
    %c0_6 = arith.constant 0 : index
    %7 = vector.load %arg4[%c0_4, %c0_5, %c0_6] : memref<1x16x128xf32, #tpu.memory_space<vmem>>, vector<1x16x128xf32>
    %8 = vector.shape_cast %6 : vector<16x128xf32> to vector<1x16x128xf32>
    %cst = arith.constant dense<0.000000e+00> : vector<16x128xf32>
    %9 = vector.multi_reduction <add>, %8, %cst [0] : vector<1x16x128xf32> to vector<16x128xf32>
    %10 = vector.shape_cast %9 : vector<16x128xf32> to vector<1x16x128xf32>
    %11 = arith.addf %7, %10 : vector<1x16x128xf32>
    %c0_7 = arith.constant 0 : index
    %c0_8 = arith.constant 0 : index
    %c0_9 = arith.constant 0 : index
    %12 = vector.load %arg4[%c0_7, %c0_8, %c0_9] : memref<1x16x128xf32, #tpu.memory_space<vmem>>, vector<1x16x128xf32>
    tpu.vector_store %arg4[%c0_7, %c0_8, %c0_9], %11 {strides = array<i32>} : memref<1x16x128xf32, #tpu.memory_space<vmem>>, vector<1x16x128xf32>,
    return
  }
  func.func @transform_0(%arg0: i32, %arg1: i32) -> (i32, i32) {
    %c1_i32 = arith.constant 1 : i32
    %0 = arith.muli %arg0, %c1_i32 : i32
    %1 = arith.addi %0, %arg1 : i32
    %c0_i32 = arith.constant 0 : i32
    %2 = arith.minsi %1, %c0_i32 : i32
    %c0_i32_0 = arith.constant 0 : i32
    %c0_i32_1 = arith.constant 0 : i32
    return %2, %c0_i32_0 : i32, i32
  }
  func.func @transform_1(%arg0: i32, %arg1: i32) -> (i32, i32) {
    %c1_i32 = arith.constant 1 : i32
    %0 = arith.muli %arg0, %c1_i32 : i32
    %1 = arith.addi %0, %arg1 : i32
    %c0_i32 = arith.constant 0 : i32
    %2 = arith.minsi %1, %c0_i32 : i32
    %c0_i32_0 = arith.constant 0 : i32
    %c0_i32_1 = arith.constant 0 : i32
    return %2, %c0_i32_0 : i32, i32
  }
  func.func @transform_2(%arg0: i32, %arg1: i32) -> (i32, i32, i32) {
    %c0_i32 = arith.constant 0 : i32
    %c0_i32_0 = arith.constant 0 : i32
    %c0_i32_1 = arith.constant 0 : i32
    return %arg0, %c0_i32, %c0_i32_0 : i32, i32, i32
  }
}

</mosaic_0001>

<llo_original>
// kernel: tpu_custom_call.1
$region0: #{tpu_custom_call.1}
  #allocation0 [shape = 'u32[]', space=smem, size = 0x4, offset = 0x4, fixed_abs, tag = 'smem constant byte address 0x4 - core index']
  #allocation1 [shape = 'u32[144,128]{1,0:T(1,128)}', space=vmem, size = 0x12000, scoped, tag = 'internal scratch']
  %s0 = inlined_call_operand.hbm [shape: f32[16,128], index: 0, kind: input, shape index: {}]
  %s1 = inlined_call_operand.hbm [shape: f32[16,128], index: 1, kind: input, shape index: {}]
  %s2 = inlined_call_operand.hbm [shape: f32[1,16,128], index: 2, kind: output, shape index: {}]
  %s3 = sld [smem:[#allocation0]]
  $region30: #{tpu_custom_call.1} parent=0
    _
  %s5 = ssub.s32 1, %s3
  %s6 = scalar_select 0, %s5, %s3
  $region1: #{tpu_custom_call.1} parent=0
    #allocation2 [shape = 'u8[8192]{0}', space=vmem, size = 0x2000, scoped, tag = 'input window, operand 0, single buffered']
    #allocation3 [shape = 's32[1]{0}', space=sflag, size = 0x4, scoped, tag = 'scoped memory for tpu_custom_call.1']
    #allocation4 [shape = 's32[1]{0}', space=sflag, size = 0x4, scoped, tag = 'scoped memory for tpu_custom_call.1']
    #allocation5 [shape = 'u8[8192]{0}', space=vmem, size = 0x2000, scoped, tag = 'input window, operand 1, single buffered']
    #allocation6 [shape = 's32[1]{0}', space=sflag, size = 0x4, scoped, tag = 'scoped memory for tpu_custom_call.1']
    #allocation7 [shape = 'u8[8192]{0}', space=vmem, size = 0x2000, scoped, tag = 'output window, operand 0, single buffered']
    %7 = vsyncpa [#allocation3], 0
    %8 = vsyncpa [#allocation6], 0
    %9 = vsyncpa [#allocation4], 0
    // Predicated region
    $region2: #{tpu_custom_call.1} parent=1 // pred_check
      _
    $region3: #{tpu_custom_call.1} parent=1 // pred_check_branch
      %11 = sbr.rel (0) target = $region5
    $region4: #{tpu_custom_call.1} parent=1 // pred_region
      %s12 = sadd.s32 0, 0
      %p13 = scmp.lt.s32.totalorder %s12, 0
      %s14 = scalar_select %p13, %s12, 0
      %s15 = smul.u32 2, %s14
      %s17 = ssub.s32 256, 256
      %18 = vsyncadd [#allocation3], %s17
      %s19 = smul.addr %s15, 128
      %s20 = scalar_lea.hbm %s0, %s19
      %s21 = sshll.u32 [#allocation2], 4
      %s22 = int_to_ptr.vmem [resolvable:$true] %s21
      %27 = dma.hbm_to_vmem [thread:$0]  %s20, 256, %s22, [#allocation3], 128, 128, 8
    $region5: #{tpu_custom_call.1} parent=1 // pred_fallthru
      _
    // Predicated region
    $region6: #{tpu_custom_call.1} parent=1 // pred_check
      _
    $region7: #{tpu_custom_call.1} parent=1 // pred_check_branch
      %29 = sbr.rel (0) target = $region9
    $region8: #{tpu_custom_call.1} parent=1 // pred_region
      %s30 = sadd.s32 0, 0
      %p31 = scmp.lt.s32.totalorder %s30, 0
      %s32 = scalar_select %p31, %s30, 0
      %s33 = smul.u32 2, %s32
      %s35 = ssub.s32 256, 256
      %36 = vsyncadd [#allocation6], %s35
      %s37 = smul.addr %s33, 128
      %s38 = scalar_lea.hbm %s1, %s37
      %s39 = sshll.u32 [#allocation5], 4
      %s40 = int_to_ptr.vmem [resolvable:$true] %s39
      %45 = dma.hbm_to_vmem [thread:$0]  %s38, 256, %s40, [#allocation6], 128, 128, 8
    $region9: #{tpu_custom_call.1} parent=1 // pred_fallthru
      _
    // Predicated region
    $region10: #{tpu_custom_call.1} parent=1 // pred_check
      _
    $region11: #{tpu_custom_call.1} parent=1 // pred_check_branch
      %47 = sbr.rel (0) target = $region13
    $region12: #{tpu_custom_call.1} parent=1 // pred_region
      %48 = dma.done [#allocation3], 256
    $region13: #{tpu_custom_call.1} parent=1 // pred_fallthru
      _
    // Predicated region
    $region14: #{tpu_custom_call.1} parent=1 // pred_check
      _
    $region15: #{tpu_custom_call.1} parent=1 // pred_check_branch
      %50 = sbr.rel (0) target = $region17
    $region16: #{tpu_custom_call.1} parent=1 // pred_region
      %51 = dma.done [#allocation6], 256
    $region17: #{tpu_custom_call.1} parent=1 // pred_fallthru
      _
    %s52 = sadd.s32 0, 0
    %p53 = scmp.lt.s32.totalorder %s52, 0
    %s54 = scalar_select %p53, %s52, 0
    %s55 = smul.u32 2, %s54
    %s56 = sadd.s32 0, 0
    %p57 = scmp.lt.s32.totalorder %s56, 0
    %s58 = scalar_select %p57, %s56, 0
    %s59 = smul.u32 2, %s58
    %p60 = scmp.eq.s32.totalorder 0, 0
    // Predicated region
    $region18: #{tpu_custom_call.1} parent=1 // pred_check
      %p61 = pneg %p60
    $region19: #{tpu_custom_call.1} parent=1 // pred_check_branch
      %63 = sbr.rel (%p61) target = $region21
    $region20: #{tpu_custom_call.1} parent=1 // pred_region
      %64 = vst [vmem:[#allocation7] sm:$0xff] 0.0
      %65 = vst [vmem:[#allocation7 + $0x8] sm:$0xff] 0.0
    $region21: #{tpu_custom_call.1} parent=1 // pred_fallthru
      _
    %v66 = vld [vmem:[#allocation2] sm:$0xff]
    %v67 = vld [vmem:[#allocation2 + $0x8] sm:$0xff]
    %v68 = vld [vmem:[#allocation5] sm:$0xff]
    %v69 = vld [vmem:[#allocation5 + $0x8] sm:$0xff]
    %v70 = vsub.f32 %v66, %v68
    %v71 = vsub.f32 %v67, %v69
    %v72 = vand.u32 2147483647, %v70
    %v73 = vand.u32 2147483647, %v71
    %v74 = vld [vmem:[#allocation7] sm:$0xff]
    %v75 = vld [vmem:[#allocation7 + $0x8] sm:$0xff]
    %v76 = vadd.f32 %v72, 0.0
    %v77 = vadd.f32 %v73, 0.0
    %v78 = vadd.f32 %v74, %v76
    %v79 = vadd.f32 %v75, %v77
    %80 = vst [vmem:[#allocation7] sm:$0xff] %v78
    %81 = vst [vmem:[#allocation7 + $0x8] sm:$0xff] %v79
    // Predicated region
    $region22: #{tpu_custom_call.1} parent=1 // pred_check
      _
    $region23: #{tpu_custom_call.1} parent=1 // pred_check_branch
      %83 = sbr.rel (0) target = $region25
    $region24: #{tpu_custom_call.1} parent=1 // pred_region
      %s85 = ssub.s32 256, 256
      %86 = vsyncadd [#allocation4], %s85
      %s87 = sshll.u32 [#allocation7], 4
      %s88 = int_to_ptr.vmem [resolvable:$true] %s87
      %93 = dma.vmem_to_hbm [thread:$0]  %s88, 256, %s2, [#allocation4], 128, 128, 8
    $region25: #{tpu_custom_call.1} parent=1 // pred_fallthru
      _
    // Predicated region
    $region26: #{tpu_custom_call.1} parent=1 // pred_check
      _
    $region27: #{tpu_custom_call.1} parent=1 // pred_check_branch
      %95 = sbr.rel (0) target = $region29
    $region28: #{tpu_custom_call.1} parent=1 // pred_region
      %96 = dma.done [#allocation4], 256
    $region29: #{tpu_custom_call.1} parent=1 // pred_fallthru
      _
    %97 = vsyncpa [#allocation3], 1
    %98 = vsyncpa [#allocation6], 1
    %99 = vsyncpa [#allocation4], 1

</llo_original>
